<compile_context>
chip_gen: v7x
topology: tpu7x:2x2x1
jax: 0.10.0
libtpu: 0.0.40
codegen_flags: <defaults>
</compile_context>

<pallas_src>
import functools

import jax
import jax.numpy as jnp
from jax import lax
from jax.experimental import pallas as pl
from jax.experimental.pallas import tpu as pltpu

NBACTIONS = 4
CLIPVAL = 2.0

HEAD_LANES = 128          # fused head output width (one full vreg of lanes)
VAL_LANE = NBACTIONS      # lane 4 of the fused head output = h2v

# rows_hs packing (row index)
R_BI2H, R_WMF, R_BMF, R_WMOD, R_BMOD = 0, 1, 2, 3, 4
N_ROWS = 5


# ---------------------------------------------------------------------------
# rollout kernel: one grid step = TB timesteps for one batch block
# ---------------------------------------------------------------------------
def rollout_kernel(x_ref, h0_ref, hebb0_ref, wi2h_ref, wa_ref, rows_ref,
                   hw_ref, hb_ref, heads_ref, hout_ref, hebbout_ref,
                   hact_sc, *, unroll):
    """grid = (num_batch_blocks, T // TB).

    Axis 0 ("parallel"): independent batch blocks (uses both TCs on v7x).
    Axis 1 ("arbitrary"): time chunks; the running h / hebb state is carried in
    the VMEM-resident output blocks (their index is constant over this axis).
    Padded batch rows evolve finite, clipped garbage state; the wrapper slices
    them off — never read them.
    """
    t = pl.program_id(1)
    TB, Bb, HS = hact_sc.shape

    # Running state lives directly in the output blocks; seed them from the
    # initial hidden state on the first time chunk (before any read).
    @pl.when(t == 0)
    def _():
        hout_ref[...] = h0_ref[...]
        hebbout_ref[...] = hebb0_ref[...]

    # Hoist all weight reads out of the time loop (broadcasts stay implicit in
    # the muls: materializing a (Bb,HS,HS) alpha would pin ~32 vregs and force
    # spills at HS=32; the per-iteration splat is cheaper here).
    wi2h = wi2h_ref[...]                          # (isize, HS)
    w = wa_ref[:HS, :]                            # (HS, HS)
    alpha = wa_ref[HS:, :]                        # (HS, HS)
    bi2h = rows_ref[R_BI2H:R_BI2H + 1, :]         # (1, HS)
    wmf = rows_ref[R_WMF:R_WMF + 1, :]            # (1, HS)  modfanout weight row
    bmf = rows_ref[R_BMF:R_BMF + 1, :]            # (1, HS)  modfanout bias
    wmod = rows_ref[R_WMOD:R_WMOD + 1, :]         # (1, HS)  h2mod weight row
    bmod = rows_ref[R_BMOD:R_BMOD + 1, 0:1]       # (1, 1)   h2mod bias

    def step(i, carry):
        h, hebb = carry
        x = x_ref[i]                              # (Bb, isize)
        # i2h(x) + h.w  -> MXU (otherwise idle)
        pre = jnp.dot(x, wi2h, preferred_element_type=jnp.float32) + bi2h
        pre = pre + jnp.dot(h, w, preferred_element_type=jnp.float32)
        # plastic part: sum_j h_bj * alpha_jk * hebb_bjk  (VPU + sublane reduce)
        pre = pre + jnp.sum((h[:, :, None] * alpha[None, :, :]) * hebb, axis=1)
        hactiv = jnp.tanh(pre)                    # (Bb, HS)
        hact_sc[i] = hactiv                       # buffered for deferred heads
        # neuromodulator: myeta = modfanout(tanh(h2mod(hactiv)))
        mod = jnp.tanh(jnp.sum(hactiv * wmod, axis=-1, keepdims=True) + bmod)
        m = (mod * wmf + bmf) * hactiv            # (Bb, HS) = myeta * hactiv
        # fused Hebbian update: hebb += outer(h, myeta*hactiv), clipped
        hebb = jnp.clip(hebb + h[:, :, None] * m[:, None, :], -CLIPVAL, CLIPVAL)
        return hactiv, hebb

    h_fin, hebb_fin = lax.fori_loop(0, TB, step,
                                    (hout_ref[...], hebbout_ref[...]),
                                    unroll=unroll)
    hout_ref[...] = h_fin
    hebbout_ref[...] = hebb_fin

    # Deferred fused heads (h2o | h2v): one (TB*Bb, HS) x (HS, 128) MXU matmul
    # per chunk, lane-dense output.
    hact = hact_sc[...].reshape(TB * Bb, HS)
    heads = jnp.dot(hact, hw_ref[...], preferred_element_type=jnp.float32) + hb_ref[...]
    heads_ref[...] = heads.reshape(TB, Bb, HEAD_LANES)


# ---------------------------------------------------------------------------
# wrappers
# ---------------------------------------------------------------------------
def _pad_axis(a, axis, target):
    n = a.shape[axis]
    if n == target:
        return a
    pads = [(0, 0)] * a.ndim
    pads[axis] = (0, target - n)
    return jnp.pad(a, pads)


def _pick_tb(T):
    if T <= 16:
        return T
    for d in range(16, 0, -1):
        if T % d == 0:
            return d
    return 1


def _vmem_limit_bytes(tb, bb, hs, isize):
    f32 = 4
    est = f32 * (
        2 * tb * bb * isize                              # streamed x (double-buffered)
        + 2 * (bb * hs + bb * hs * hs)                   # h0/hebb0 + resident h/hebb outs
        + isize * hs + 2 * hs * hs + N_ROWS * hs
        + hs * HEAD_LANES + HEAD_LANES                   # packed weights
        + 2 * tb * bb * HEAD_LANES                       # heads output (double-buffered)
        + tb * bb * hs                                   # hact scratch
        + 8 * bb * hs * hs                               # in-step temporaries / spills
    )
    return int(min(max(2 * est, 32 * 2 ** 20), 64 * 2 ** 20))


@functools.partial(jax.jit, static_argnames=("tb", "nb"))
def network_rollout(packed, xs, hidden, tb=None, nb=1):
    """T fused RNN steps in one pallas_call; state stays resident in VMEM.

    tb: timesteps per grid step (must divide T; default: whole rollout if T<=16).
    nb: number of batch blocks (leading "parallel" grid axis; use 2 on v7x).
    """
    h0, hebb0 = hidden
    T, B, isize = xs.shape
    HS = h0.shape[1]
    if tb is None:
        tb = _pick_tb(T)
    assert T % tb == 0, "tb must divide T"
    nt = T // tb
    blk = 8 * nb                                   # each batch block >= 8 sublanes
    Bp = ((B + blk - 1) // blk) * blk
    Bb = Bp // nb

    xs_p = _pad_axis(xs, 1, Bp)
    h0_p = _pad_axis(h0, 0, Bp)
    hebb_p = _pad_axis(hebb0, 0, Bp)

    in_specs = [
        pl.BlockSpec((tb, Bb, isize), lambda b, t: (t, b, 0)),       # x chunk (streamed)
        pl.BlockSpec((Bb, HS), lambda b, t: (b, 0)),                 # h0
        pl.BlockSpec((Bb, HS, HS), lambda b, t: (b, 0, 0)),          # hebb0
        pl.BlockSpec((isize, HS), lambda b, t: (0, 0)),              # wi2h_t
        pl.BlockSpec((2 * HS, HS), lambda b, t: (0, 0)),             # [w; alpha]
        pl.BlockSpec((N_ROWS, HS), lambda b, t: (0, 0)),             # packed rows
        pl.BlockSpec((HS, HEAD_LANES), lambda b, t: (0, 0)),         # fused head W
        pl.BlockSpec((1, HEAD_LANES), lambda b, t: (0, 0)),          # fused head b
    ]
    out_specs = (
        pl.BlockSpec((tb, Bb, HEAD_LANES), lambda b, t: (t, b, 0)),  # per-step heads
        pl.BlockSpec((Bb, HS), lambda b, t: (b, 0)),                 # final h (carries state)
        pl.BlockSpec((Bb, HS, HS), lambda b, t: (b, 0, 0)),          # final hebb (carries state)
    )
    out_shapes = (
        jax.ShapeDtypeStruct((T, Bp, HEAD_LANES), jnp.float32),
        jax.ShapeDtypeStruct((Bp, HS), jnp.float32),
        jax.ShapeDtypeStruct((Bp, HS, HS), jnp.float32),
    )
    kernel = functools.partial(rollout_kernel, unroll=True if tb <= 16 else 8)
    heads_all, h_fin, hebb_fin = pl.pallas_call(
        kernel,
        grid=(nb, nt),
        in_specs=in_specs,
        out_specs=out_specs,
        out_shape=out_shapes,
        scratch_shapes=[pltpu.VMEM((tb, Bb, HS), jnp.float32)],
        input_output_aliases={1: 1, 2: 2},          # h and hebb updated in place
        compiler_params=pltpu.CompilerParams(
            dimension_semantics=("parallel", "arbitrary"),
            vmem_limit_bytes=_vmem_limit_bytes(tb, Bb, HS, isize)),
    )(xs_p, h0_p, hebb_p, packed["wi2h_t"], packed["wa"], packed["rows_hs"],
      packed["heads_w"], packed["heads_b"])

    activout = heads_all[:, :B, :NBACTIONS]
    valueout = heads_all[:, :B, VAL_LANE:VAL_LANE + 1]
    return activout, valueout, (h_fin[:B], hebb_fin[:B])


@jax.jit
def network_forward(packed, inputs, hidden):
    """One RNN step; exact semantics of Network.forward.
    Prefer network_rollout whenever more than one step is taken."""
    acts, vals, hid = network_rollout(packed, inputs[None], hidden, tb=1, nb=1)
    return acts[0], vals[0], hid


# ---------------------------------------------------------------------------
# parameters (raw = PyTorch layout) and packing
# ---------------------------------------------------------------------------
def init_params(key, isize, hsize):
    ks = jax.random.split(key, 12)

    def lin(kw, kb, fan_in, fan_out):
        s = 1.0 / (fan_in ** 0.5)
        wgt = jax.random.uniform(kw, (fan_out, fan_in), jnp.float32, -s, s)
        b = jax.random.uniform(kb, (fan_out,), jnp.float32, -s, s)
        return wgt, b

    i2h_w, i2h_b = lin(ks[0], ks[1], isize, hsize)
    h2mod_w, h2mod_b = lin(ks[2], ks[3], hsize, 1)
    modf_w, modf_b = lin(ks[4], ks[5], 1, hsize)
    h2o_w, h2o_b = lin(ks[6], ks[7], hsize, NBACTIONS)
    h2v_w, h2v_b = lin(ks[8], ks[9], hsize, 1)
    w = 0.001 * jax.random.uniform(ks[10], (hsize, hsize), jnp.float32)
    alpha = 0.001 * jax.random.uniform(ks[11], (hsize, hsize), jnp.float32)
    return dict(i2h_w=i2h_w, i2h_b=i2h_b, w=w, alpha=alpha,
                h2mod_w=h2mod_w, h2mod_b=h2mod_b,
                modfanout_w=modf_w, modfanout_b=modf_b,
                h2o_w=h2o_w, h2o_b=h2o_b, h2v_w=h2v_w, h2v_b=h2v_b)


def pack_params(raw):
    hsize = raw["w"].shape[0]
    wi2h_t = raw["i2h_w"].T                                         # (isize, HS)
    wa = jnp.concatenate([raw["w"], raw["alpha"]], axis=0)          # (2*HS, HS)
    rows_hs = jnp.stack([
        raw["i2h_b"],                                               # R_BI2H
        raw["modfanout_w"][:, 0],                                   # R_WMF
        raw["modfanout_b"],                                         # R_BMF
        raw["h2mod_w"][0],                                          # R_WMOD
        jnp.full((hsize,), raw["h2mod_b"][0], jnp.float32),         # R_BMOD
    ], axis=0)                                                      # (5, HS)
    heads_w = jnp.zeros((hsize, HEAD_LANES), jnp.float32)
    heads_w = heads_w.at[:, :NBACTIONS].set(raw["h2o_w"].T)
    heads_w = heads_w.at[:, VAL_LANE].set(raw["h2v_w"][0])
    heads_b = jnp.zeros((1, HEAD_LANES), jnp.float32)
    heads_b = heads_b.at[0, :NBACTIONS].set(raw["h2o_b"])
    heads_b = heads_b.at[0, VAL_LANE].set(raw["h2v_b"][0])
    return dict(wi2h_t=wi2h_t, wa=wa, rows_hs=rows_hs,
                heads_w=heads_w, heads_b=heads_b)


# ---------------------------------------------------------------------------
# pure-JAX reference mirroring the PyTorch forward exactly
# ---------------------------------------------------------------------------
def reference_forward(raw, inputs, hidden):
    h0, hebb = hidden
    pre = inputs @ raw["i2h_w"].T + raw["i2h_b"]
    plastic = raw["w"][None] + raw["alpha"][None] * hebb
    rec = jnp.einsum("bh,bhk->bk", h0, plastic)
    hactiv = jnp.tanh(pre + rec)
    activout = hactiv @ raw["h2o_w"].T + raw["h2o_b"]
    valueout = hactiv @ raw["h2v_w"].T + raw["h2v_b"]
    deltahebb = h0[:, :, None] * hactiv[:, None, :]
    mod = jnp.tanh(hactiv @ raw["h2mod_w"].T + raw["h2mod_b"])      # (B, 1)
    myeta = mod * raw["modfanout_w"][:, 0][None, :] + raw["modfanout_b"][None, :]
    hebb_new = jnp.clip(hebb + myeta[:, None, :] * deltahebb, -CLIPVAL, CLIPVAL)
    return activout, valueout, (hactiv, hebb_new)


if __name__ == "__main__":
    B, ISIZE, HSIZE, T = 2, 16, 32, 8
    key = jax.random.PRNGKey(0)
    kp, kx, kh, kb, ks = jax.random.split(key, 5)

    raw = init_params(kp, ISIZE, HSIZE)
    packed = pack_params(raw)

    inputs = jax.random.normal(kx, (B, ISIZE), jnp.float32)
    h0 = 0.1 * jax.random.normal(kh, (B, HSIZE), jnp.float32)
    hebb0 = 0.1 * jax.random.normal(kb, (B, HSIZE, HSIZE), jnp.float32)

    # ---- single step (matches Network.forward) ----
    act, val, (h1, hebb1) = network_forward(packed, inputs, (h0, hebb0))
    jax.block_until_ready((act, val, h1, hebb1))

    r_act, r_val, (r_h, r_hebb) = reference_forward(raw, inputs, (h0, hebb0))
    assert jnp.allclose(act, r_act, atol=1e-4, rtol=1e-4)
    assert jnp.allclose(val, r_val, atol=1e-4, rtol=1e-4)
    assert jnp.allclose(h1, r_h, atol=1e-4, rtol=1e-4)
    assert jnp.allclose(hebb1, r_hebb, atol=1e-4, rtol=1e-4)

    # ---- fused T-step rollout (whole rollout in one grid point) ----
    xs = jax.random.normal(ks, (T, B, ISIZE), jnp.float32)
    acts, vals, (hT, hebbT) = network_rollout(packed, xs, (h0, hebb0))
    jax.block_until_ready((acts, vals, hT, hebbT))

    h_ref, hebb_ref = h0, hebb0
    for t in range(T):
        a_t, v_t, (h_ref, hebb_ref) = reference_forward(raw, xs[t], (h_ref, hebb_ref))
        assert jnp.allclose(acts[t], a_t, atol=2e-4, rtol=1e-3)
        assert jnp.allclose(vals[t], v_t, atol=2e-4, rtol=1e-3)
    assert jnp.allclose(hT, h_ref, atol=2e-4, rtol=1e-3)
    assert jnp.allclose(hebbT, hebb_ref, atol=2e-4, rtol=1e-3)

    # ---- v7x path: 2 independent batch blocks on the "parallel" grid axis ----
    acts2, vals2, (hT2, hebbT2) = network_rollout(packed, xs, (h0, hebb0), nb=2)
    jax.block_until_ready((acts2, vals2, hT2, hebbT2))
    assert jnp.allclose(acts2, acts, atol=1e-5, rtol=1e-5)
    assert jnp.allclose(vals2, vals, atol=1e-5, rtol=1e-5)
    assert jnp.allclose(hT2, hT, atol=1e-5, rtol=1e-5)
    assert jnp.allclose(hebbT2, hebbT, atol=1e-5, rtol=1e-5)

    print("KERNEL_OK")
</pallas_src>

<mosaic_0001>
module attributes {stable_mosaic.version = 11 : i64} {
  func.func @rollout_kernel(%arg0: i32, %arg1: i32, %arg2: memref<1x8x16xf32, #tpu.memory_space<vmem>>, %arg3: memref<8x32xf32, #tpu.memory_space<vmem>>, %arg4: memref<8x32x32xf32, #tpu.memory_space<vmem>>, %arg5: memref<16x32xf32, #tpu.memory_space<vmem>>, %arg6: memref<64x32xf32, #tpu.memory_space<vmem>>, %arg7: memref<5x32xf32, #tpu.memory_space<vmem>>, %arg8: memref<32x128xf32, #tpu.memory_space<vmem>>, %arg9: memref<1x128xf32, #tpu.memory_space<vmem>>, %arg10: memref<1x8x128xf32, #tpu.memory_space<vmem>>, %arg11: memref<8x32xf32, #tpu.memory_space<vmem>>, %arg12: memref<8x32x32xf32, #tpu.memory_space<vmem>>, %arg13: memref<1x8x32xf32, #tpu.memory_space<vmem>>) attributes {dimension_semantics = [#tpu.dimension_semantics<parallel>, #tpu.dimension_semantics<arbitrary>], iteration_bounds = array<i64: 1, 1>, scalar_prefetch = 0 : i64, scratch_operands = 1 : i64, tpu.core_type = #tpu.core_type<tc>, window_params = [{transform_indices = @transform_0, window_bounds = array<i64: 1, 8, 16>}, {transform_indices = @transform_1, window_bounds = array<i64: 8, 32>}, {transform_indices = @transform_2, window_bounds = array<i64: 8, 32, 32>}, {pipeline_mode = #tpu.pipeline_mode<synchronous>, transform_indices = @transform_3, window_bounds = array<i64: 16, 32>}, {pipeline_mode = #tpu.pipeline_mode<synchronous>, transform_indices = @transform_4, window_bounds = array<i64: 64, 32>}, {pipeline_mode = #tpu.pipeline_mode<synchronous>, transform_indices = @transform_5, window_bounds = array<i64: 5, 32>}, {pipeline_mode = #tpu.pipeline_mode<synchronous>, transform_indices = @transform_6, window_bounds = array<i64: 32, 128>}, {pipeline_mode = #tpu.pipeline_mode<synchronous>, transform_indices = @transform_7, window_bounds = array<i64: 1, 128>}, {transform_indices = @transform_8, window_bounds = array<i64: 1, 8, 128>}, {transform_indices = @transform_9, window_bounds = array<i64: 8, 32>}, {transform_indices = @transform_10, window_bounds = array<i64: 8, 32, 32>}]} {
    %c0_i32 = arith.constant 0 : i32
    %0 = arith.cmpi eq, %arg1, %c0_i32 : i32
    %1 = arith.extui %0 : i1 to i32
    %c0_i32_0 = arith.constant 0 : i32
    %2 = arith.cmpi ne, %1, %c0_i32_0 : i32
    scf.if %2 {
      %c0_42 = arith.constant 0 : index
      %c0_43 = arith.constant 0 : index
      %68 = vector.load %arg3[%c0_42, %c0_43] : memref<8x32xf32, #tpu.memory_space<vmem>>, vector<8x32xf32>
      %c0_44 = arith.constant 0 : index
      %c0_45 = arith.constant 0 : index
      %69 = vector.load %arg11[%c0_44, %c0_45] : memref<8x32xf32, #tpu.memory_space<vmem>>, vector<8x32xf32>
      tpu.vector_store %arg11[%c0_44, %c0_45], %68 {strides = array<i32>} : memref<8x32xf32, #tpu.memory_space<vmem>>, vector<8x32xf32>,
      %c0_46 = arith.constant 0 : index
      %c0_47 = arith.constant 0 : index
      %c0_48 = arith.constant 0 : index
      %70 = vector.load %arg4[%c0_46, %c0_47, %c0_48] : memref<8x32x32xf32, #tpu.memory_space<vmem>>, vector<8x32x32xf32>
      %c0_49 = arith.constant 0 : index
      %c0_50 = arith.constant 0 : index
      %c0_51 = arith.constant 0 : index
      %71 = vector.load %arg12[%c0_49, %c0_50, %c0_51] : memref<8x32x32xf32, #tpu.memory_space<vmem>>, vector<8x32x32xf32>
      tpu.vector_store %arg12[%c0_49, %c0_50, %c0_51], %70 {strides = array<i32>} : memref<8x32x32xf32, #tpu.memory_space<vmem>>, vector<8x32x32xf32>,
    } else {
    }
    %c0 = arith.constant 0 : index
    %c0_1 = arith.constant 0 : index
    %3 = vector.load %arg5[%c0, %c0_1] : memref<16x32xf32, #tpu.memory_space<vmem>>, vector<16x32xf32>
    %c0_2 = arith.constant 0 : index
    %c0_3 = arith.constant 0 : index
    %4 = vector.load %arg6[%c0_2, %c0_3] : memref<64x32xf32, #tpu.memory_space<vmem>>, vector<32x32xf32>
    %c32 = arith.constant 32 : index
    %c0_4 = arith.constant 0 : index
    %5 = vector.load %arg6[%c32, %c0_4] : memref<64x32xf32, #tpu.memory_space<vmem>>, vector<32x32xf32>
    %c0_5 = arith.constant 0 : index
    %c0_6 = arith.constant 0 : index
    %6 = vector.load %arg7[%c0_5, %c0_6] : memref<5x32xf32, #tpu.memory_space<vmem>>, vector<1x32xf32>
    %c1 = arith.constant 1 : index
    %c0_7 = arith.constant 0 : index
    %7 = vector.load %arg7[%c1, %c0_7] : memref<5x32xf32, #tpu.memory_space<vmem>>, vector<1x32xf32>
    %c2 = arith.constant 2 : index
    %c0_8 = arith.constant 0 : index
    %8 = vector.load %arg7[%c2, %c0_8] : memref<5x32xf32, #tpu.memory_space<vmem>>, vector<1x32xf32>
    %c3 = arith.constant 3 : index
    %c0_9 = arith.constant 0 : index
    %9 = vector.load %arg7[%c3, %c0_9] : memref<5x32xf32, #tpu.memory_space<vmem>>, vector<1x32xf32>
    %c4 = arith.constant 4 : index
    %c0_10 = arith.constant 0 : index
    %10 = vector.load %arg7[%c4, %c0_10] : memref<5x32xf32, #tpu.memory_space<vmem>>, vector<1x1xf32>
    %c0_11 = arith.constant 0 : index
    %c0_12 = arith.constant 0 : index
    %11 = vector.load %arg11[%c0_11, %c0_12] : memref<8x32xf32, #tpu.memory_space<vmem>>, vector<8x32xf32>
    %c0_13 = arith.constant 0 : index
    %c0_14 = arith.constant 0 : index
    %c0_15 = arith.constant 0 : index
    %12 = vector.load %arg12[%c0_13, %c0_14, %c0_15] : memref<8x32x32xf32, #tpu.memory_space<vmem>>, vector<8x32x32xf32>
    %c0_i32_16 = arith.constant 0 : i32
    %13 = arith.index_cast %c0_i32_16 : i32 to index
    %c0_17 = arith.constant 0 : index
    %c0_18 = arith.constant 0 : index
    %14 = vector.load %arg2[%13, %c0_17, %c0_18] : memref<1x8x16xf32, #tpu.memory_space<vmem>>, vector<1x8x16xf32>
    %15 = vector.shape_cast %14 : vector<1x8x16xf32> to vector<8x16xf32>
    %cst = arith.constant dense<0.000000e+00> : vector<8x32xf32>
    %16 = tpu.matmul %15, %3, %cst {dimension_numbers = #tpu.dot_dimension_numbers<[1], [0], [0], [1], [0, 0, 1, 1], [], []>} : vector<8x16xf32>, vector<16x32xf32>, vector<8x32xf32> -> vector<8x32xf32>
    %17 = vector.broadcast %6 : vector<1x32xf32> to vector<8x32xf32>
    %18 = arith.addf %16, %17 : vector<8x32xf32>
    %cst_19 = arith.constant dense<0.000000e+00> : vector<8x32xf32>
    %19 = tpu.matmul %11, %4, %cst_19 {dimension_numbers = #tpu.dot_dimension_numbers<[1], [0], [0], [1], [0, 0, 1, 1], [], []>} : vector<8x32xf32>, vector<32x32xf32>, vector<8x32xf32> -> vector<8x32xf32>
    %20 = arith.addf %18, %19 : vector<8x32xf32>
    %21 = vector.shape_cast %11 : vector<8x32xf32> to vector<8x32x1xf32>
    %22 = vector.shape_cast %5 : vector<32x32xf32> to vector<1x32x32xf32>
    %23 = vector.broadcast %21 : vector<8x32x1xf32> to vector<8x32x32xf32>
    %24 = vector.broadcast %22 : vector<1x32x32xf32> to vector<8x32x32xf32>
    %25 = arith.mulf %23, %24 : vector<8x32x32xf32>
    %26 = arith.mulf %25, %12 : vector<8x32x32xf32>
    %cst_20 = arith.constant dense<0.000000e+00> : vector<8x32xf32>
    %27 = vector.multi_reduction <add>, %26, %cst_20 [1] : vector<8x32x32xf32> to vector<8x32xf32>
    %28 = arith.addf %20, %27 : vector<8x32xf32>
    %29 = math.tanh %28 : vector<8x32xf32>
    %30 = arith.index_cast %c0_i32_16 : i32 to index
    %c0_21 = arith.constant 0 : index
    %c0_22 = arith.constant 0 : index
    %31 = vector.load %arg13[%30, %c0_21, %c0_22] : memref<1x8x32xf32, #tpu.memory_space<vmem>>, vector<1x8x32xf32>
    %32 = vector.shape_cast %31 : vector<1x8x32xf32> to vector<8x32xf32>
    %33 = vector.shape_cast %29 : vector<8x32xf32> to vector<1x8x32xf32>
    tpu.vector_store %arg13[%30, %c0_21, %c0_22], %33 {strides = array<i32>} : memref<1x8x32xf32, #tpu.memory_space<vmem>>, vector<1x8x32xf32>,
    %34 = vector.broadcast %9 : vector<1x32xf32> to vector<8x32xf32>
    %35 = arith.mulf %29, %34 : vector<8x32xf32>
    %cst_23 = arith.constant dense<0.000000e+00> : vector<8xf32>
    %36 = vector.multi_reduction <add>, %35, %cst_23 [1] : vector<8x32xf32> to vector<8xf32>
    %37 = vector.shape_cast %36 : vector<8xf32> to vector<8x1xf32>
    %38 = vector.broadcast %10 : vector<1x1xf32> to vector<8x1xf32>
    %39 = arith.addf %37, %38 : vector<8x1xf32>
    %40 = math.tanh %39 : vector<8x1xf32>
    %41 = vector.broadcast %40 : vector<8x1xf32> to vector<8x32xf32>
    %42 = vector.broadcast %7 : vector<1x32xf32> to vector<8x32xf32>
    %43 = arith.mulf %41, %42 : vector<8x32xf32>
    %44 = vector.broadcast %8 : vector<1x32xf32> to vector<8x32xf32>
    %45 = arith.addf %43, %44 : vector<8x32xf32>
    %46 = arith.mulf %45, %29 : vector<8x32xf32>
    %47 = vector.shape_cast %11 : vector<8x32xf32> to vector<8x32x1xf32>
    %48 = vector.shape_cast %46 : vector<8x32xf32> to vector<8x1x32xf32>
    %49 = vector.broadcast %47 : vector<8x32x1xf32> to vector<8x32x32xf32>
    %50 = vector.broadcast %48 : vector<8x1x32xf32> to vector<8x32x32xf32>
    %51 = arith.mulf %49, %50 : vector<8x32x32xf32>
    %52 = arith.addf %12, %51 : vector<8x32x32xf32>
    %cst_24 = arith.constant -2.000000e+00 : f32
    %cst_25 = arith.constant 2.000000e+00 : f32
    %53 = vector.broadcast %cst_24 : f32 to vector<8x32x32xf32>
    %54 = arith.maximumf %53, %52 : vector<8x32x32xf32>
    %55 = vector.broadcast %cst_25 : f32 to vector<8x32x32xf32>
    %56 = arith.minimumf %55, %54 : vector<8x32x32xf32>
    %c1_i32 = arith.constant 1 : i32
    %c0_26 = arith.constant 0 : index
    %c0_27 = arith.constant 0 : index
    %57 = vector.load %arg11[%c0_26, %c0_27] : memref<8x32xf32, #tpu.memory_space<vmem>>, vector<8x32xf32>
    tpu.vector_store %arg11[%c0_26, %c0_27], %29 {strides = array<i32>} : memref<8x32xf32, #tpu.memory_space<vmem>>, vector<8x32xf32>,
    %c0_28 = arith.constant 0 : index
    %c0_29 = arith.constant 0 : index
    %c0_30 = arith.constant 0 : index
    %58 = vector.load %arg12[%c0_28, %c0_29, %c0_30] : memref<8x32x32xf32, #tpu.memory_space<vmem>>, vector<8x32x32xf32>
    tpu.vector_store %arg12[%c0_28, %c0_29, %c0_30], %56 {strides = array<i32>} : memref<8x32x32xf32, #tpu.memory_space<vmem>>, vector<8x32x32xf32>,
    %c0_31 = arith.constant 0 : index
    %c0_32 = arith.constant 0 : index
    %c0_33 = arith.constant 0 : index
    %59 = vector.load %arg13[%c0_31, %c0_32, %c0_33] : memref<1x8x32xf32, #tpu.memory_space<vmem>>, vector<1x8x32xf32>
    %60 = vector.shape_cast %59 : vector<1x8x32xf32> to vector<8x32xf32>
    %c0_34 = arith.constant 0 : index
    %c0_35 = arith.constant 0 : index
    %61 = vector.load %arg8[%c0_34, %c0_35] : memref<32x128xf32, #tpu.memory_space<vmem>>, vector<32x128xf32>
    %cst_36 = arith.constant dense<0.000000e+00> : vector<8x128xf32>
    %62 = tpu.matmul %60, %61, %cst_36 {dimension_numbers = #tpu.dot_dimension_numbers<[1], [0], [0], [1], [0, 0, 1, 1], [], []>} : vector<8x32xf32>, vector<32x128xf32>, vector<8x128xf32> -> vector<8x128xf32>
    %c0_37 = arith.constant 0 : index
    %c0_38 = arith.constant 0 : index
    %63 = vector.load %arg9[%c0_37, %c0_38] : memref<1x128xf32, #tpu.memory_space<vmem>>, vector<1x128xf32>
    %64 = vector.broadcast %63 : vector<1x128xf32> to vector<8x128xf32>
    %65 = arith.addf %62, %64 : vector<8x128xf32>
    %66 = vector.shape_cast %65 : vector<8x128xf32> to vector<1x8x128xf32>
    %c0_39 = arith.constant 0 : index
    %c0_40 = arith.constant 0 : index
    %c0_41 = arith.constant 0 : index
    %67 = vector.load %arg10[%c0_39, %c0_40, %c0_41] : memref<1x8x128xf32, #tpu.memory_space<vmem>>, vector<1x8x128xf32>
    tpu.vector_store %arg10[%c0_39, %c0_40, %c0_41], %66 {strides = array<i32>} : memref<1x8x128xf32, #tpu.memory_space<vmem>>, vector<1x8x128xf32>,
    return
  }
  func.func @transform_0(%arg0: i32, %arg1: i32) -> (i32, i32, i32) {
    %c0_i32 = arith.constant 0 : i32
    %c0_i32_0 = arith.constant 0 : i32
    return %arg1, %arg0, %c0_i32 : i32, i32, i32
  }
  func.func @transform_1(%arg0: i32, %arg1: i32) -> (i32, i32) {
    %c0_i32 = arith.constant 0 : i32
    %c0_i32_0 = arith.constant 0 : i32
    return %arg0, %c0_i32 : i32, i32
  }
  func.func @transform_2(%arg0: i32, %arg1: i32) -> (i32, i32, i32) {
    %c0_i32 = arith.constant 0 : i32
    %c0_i32_0 = arith.constant 0 : i32
    %c0_i32_1 = arith.constant 0 : i32
    return %arg0, %c0_i32, %c0_i32_0 : i32, i32, i32
  }
  func.func @transform_3(%arg0: i32, %arg1: i32) -> (i32, i32) {
    %c0_i32 = arith.constant 0 : i32
    %c0_i32_0 = arith.constant 0 : i32
    %c0_i32_1 = arith.constant 0 : i32
    return %c0_i32, %c0_i32_0 : i32, i32
  }
  func.func @transform_4(%arg0: i32, %arg1: i32) -> (i32, i32) {
    %c0_i32 = arith.constant 0 : i32
    %c0_i32_0 = arith.constant 0 : i32
    %c0_i32_1 = arith.constant 0 : i32
    return %c0_i32, %c0_i32_0 : i32, i32
  }
  func.func @transform_5(%arg0: i32, %arg1: i32) -> (i32, i32) {
    %c0_i32 = arith.constant 0 : i32
    %c0_i32_0 = arith.constant 0 : i32
    %c0_i32_1 = arith.constant 0 : i32
    return %c0_i32, %c0_i32_0 : i32, i32
  }
  func.func @transform_6(%arg0: i32, %arg1: i32) -> (i32, i32) {
    %c0_i32 = arith.constant 0 : i32
    %c0_i32_0 = arith.constant 0 : i32
    %c0_i32_1 = arith.constant 0 : i32
    return %c0_i32, %c0_i32_0 : i32, i32
  }
  func.func @transform_7(%arg0: i32, %arg1: i32) -> (i32, i32) {
    %c0_i32 = arith.constant 0 : i32
    %c0_i32_0 = arith.constant 0 : i32
    %c0_i32_1 = arith.constant 0 : i32
    return %c0_i32, %c0_i32_0 : i32, i32
  }
  func.func @transform_8(%arg0: i32, %arg1: i32) -> (i32, i32, i32) {
    %c0_i32 = arith.constant 0 : i32
    %c0_i32_0 = arith.constant 0 : i32
    return %arg1, %arg0, %c0_i32 : i32, i32, i32
  }
  func.func @transform_9(%arg0: i32, %arg1: i32) -> (i32, i32) {
    %c0_i32 = arith.constant 0 : i32
    %c0_i32_0 = arith.constant 0 : i32
    return %arg0, %c0_i32 : i32, i32
  }
  func.func @transform_10(%arg0: i32, %arg1: i32) -> (i32, i32, i32) {
    %c0_i32 = arith.constant 0 : i32
    %c0_i32_0 = arith.constant 0 : i32
    %c0_i32_1 = arith.constant 0 : i32
    return %arg0, %c0_i32, %c0_i32_0 : i32, i32, i32
  }
}

</mosaic_0001>

<llo_original>
// kernel: network_rollout.1
$region0: #{network_rollout.1}
  #allocation0 [shape = 'u32[]', space=smem, size = 0x4, offset = 0x4, fixed_abs, tag = 'smem constant byte address 0x4 - core index']
  #allocation1 [shape = 'u32[144,128]{1,0:T(1,128)}', space=vmem, size = 0x12000, scoped, tag = 'internal scratch']
  #allocation2 [shape = 'f32[1,8,32]{2,1,0:T(8,128)}', space=vmem, size = 0x1000, scoped, tag = 'scratch operand']
  %s0 = inlined_call_operand.vmem [shape: f32[1,8,16], index: 0, kind: input, shape index: {}]
  %s1 = inlined_call_operand.vmem [shape: f32[8,32], index: 1, kind: input, shape index: {}, may-alias: {1,9}]
  %s2 = inlined_call_operand.vmem [shape: f32[8,32,32], index: 2, kind: input, shape index: {}, may-alias: {2,10}]
  %s3 = inlined_call_operand.vmem [shape: f32[16,32], index: 3, kind: input, shape index: {}]
  %s4 = inlined_call_operand.vmem [shape: f32[64,32], index: 4, kind: input, shape index: {}]
  %s5 = inlined_call_operand.vmem [shape: f32[5,32], index: 5, kind: input, shape index: {}]
  %s6 = inlined_call_operand.vmem [shape: f32[32,128], index: 6, kind: input, shape index: {}]
  %s7 = inlined_call_operand.vmem [shape: f32[1,128], index: 7, kind: input, shape index: {}]
  %s8 = inlined_call_operand.vmem [shape: f32[1,8,128], index: 8, kind: output, shape index: {0}]
  %s9 = inlined_call_operand.vmem [shape: f32[8,32], index: 9, kind: output, shape index: {1}, may-alias: {1,9}]
  %s10 = inlined_call_operand.vmem [shape: f32[8,32,32], index: 10, kind: output, shape index: {2}, may-alias: {2,10}]
  %11 = xla_tuple %s8, %s9, %s10
  %s12 = sld [smem:[#allocation0]]
  $region62: #{network_rollout.1} parent=0
    _
  %s14 = ssub.s32 1, %s12
  %s15 = scalar_select 0, %s14, %s12
  // Predicated region
  $region2: #{network_rollout.1} parent=0 // pred_check
    _
  $region3: #{network_rollout.1} parent=0 // pred_check_branch
    %17 = sbr.rel (0) target = $region5
  $region4: #{network_rollout.1} parent=0 // pred_region
    _
  $region5: #{network_rollout.1} parent=0 // pred_fallthru
    _
  // Predicated region
  $region6: #{network_rollout.1} parent=0 // pred_check
    _
  $region7: #{network_rollout.1} parent=0 // pred_check_branch
    %19 = sbr.rel (0) target = $region9
  $region8: #{network_rollout.1} parent=0 // pred_region
    _
  $region9: #{network_rollout.1} parent=0 // pred_fallthru
    _
  // Predicated region
  $region10: #{network_rollout.1} parent=0 // pred_check
    _
  $region11: #{network_rollout.1} parent=0 // pred_check_branch
    %21 = sbr.rel (0) target = $region13
  $region12: #{network_rollout.1} parent=0 // pred_region
    _
  $region13: #{network_rollout.1} parent=0 // pred_fallthru
    _
  // Predicated region
  $region14: #{network_rollout.1} parent=0 // pred_check
    _
  $region15: #{network_rollout.1} parent=0 // pred_check_branch
    %23 = sbr.rel (0) target = $region17
  $region16: #{network_rollout.1} parent=0 // pred_region
    _
  $region17: #{network_rollout.1} parent=0 // pred_fallthru
    _
  // Predicated region
  $region18: #{network_rollout.1} parent=0 // pred_check
    _
  $region19: #{network_rollout.1} parent=0 // pred_check_branch
    %25 = sbr.rel (0) target = $region21
  $region20: #{network_rollout.1} parent=0 // pred_region
    _
  $region21: #{network_rollout.1} parent=0 // pred_fallthru
    _
  // Predicated region
  $region22: #{network_rollout.1} parent=0 // pred_check
    _
  $region23: #{network_rollout.1} parent=0 // pred_check_branch
    %27 = sbr.rel (0) target = $region25
  $region24: #{network_rollout.1} parent=0 // pred_region
    _
  $region25: #{network_rollout.1} parent=0 // pred_fallthru
    _
  // Predicated region
  $region26: #{network_rollout.1} parent=0 // pred_check
    _
  $region27: #{network_rollout.1} parent=0 // pred_check_branch
    %29 = sbr.rel (0) target = $region29
  $region28: #{network_rollout.1} parent=0 // pred_region
    _
  $region29: #{network_rollout.1} parent=0 // pred_fallthru
    _
  // Predicated region
  $region30: #{network_rollout.1} parent=0 // pred_check
    _
  $region31: #{network_rollout.1} parent=0 // pred_check_branch
    %31 = sbr.rel (0) target = $region33
  $region32: #{network_rollout.1} parent=0 // pred_region
    _
  $region33: #{network_rollout.1} parent=0 // pred_fallthru
    _
  %p32 = scmp.eq.s32.totalorder 0, 0
  // Predicated region
  $region34: #{network_rollout.1} parent=0 // pred_check
    %p33 = pneg %p32
  $region35: #{network_rollout.1} parent=0 // pred_check_branch
    %35 = sbr.rel (%p33) target = $region37
  $region36: #{network_rollout.1} parent=0 // pred_region
    %v36 = vld [vmem:[%s1] sm:$0xff]
    %vm37 = vcmask 261120
    %38 = vst.msk [vmem:[%s9] sm:$0xff] %vm37, %v36
    %v39 = vld [vmem:[%s2] sm:$0xff]
    %v40 = vld [vmem:[%s2 + $0x8] sm:$0xff]
    %v41 = vld [vmem:[%s2 + $0x10] sm:$0xff]
    %v42 = vld [vmem:[%s2 + $0x18] sm:$0xff]
    %v43 = vld [vmem:[%s2 + $0x20] sm:$0xff]
    %v44 = vld [vmem:[%s2 + $0x28] sm:$0xff]
    %v45 = vld [vmem:[%s2 + $0x30] sm:$0xff]
    %v46 = vld [vmem:[%s2 + $0x38] sm:$0xff]
    %v47 = vld [vmem:[%s2 + $0x40] sm:$0xff]
    %v48 = vld [vmem:[%s2 + $0x48] sm:$0xff]
    %v49 = vld [vmem:[%s2 + $0x50] sm:$0xff]
    %v50 = vld [vmem:[%s2 + $0x58] sm:$0xff]
    %v51 = vld [vmem:[%s2 + $0x60] sm:$0xff]
    %v52 = vld [vmem:[%s2 + $0x68] sm:$0xff]
    %v53 = vld [vmem:[%s2 + $0x70] sm:$0xff]
    %v54 = vld [vmem:[%s2 + $0x78] sm:$0xff]
    %v55 = vld [vmem:[%s2 + $0x80] sm:$0xff]
    %v56 = vld [vmem:[%s2 + $0x88] sm:$0xff]
    %v57 = vld [vmem:[%s2 + $0x90] sm:$0xff]
    %v58 = vld [vmem:[%s2 + $0x98] sm:$0xff]
    %v59 = vld [vmem:[%s2 + $0xa0] sm:$0xff]
    %v60 = vld [vmem:[%s2 + $0xa8] sm:$0xff]
    %v61 = vld [vmem:[%s2 + $0xb0] sm:$0xff]
    %v62 = vld [vmem:[%s2 + $0xb8] sm:$0xff]
    %v63 = vld [vmem:[%s2 + $0xc0] sm:$0xff]
    %v64 = vld [vmem:[%s2 + $0xc8] sm:$0xff]
    %v65 = vld [vmem:[%s2 + $0xd0] sm:$0xff]
    %v66 = vld [vmem:[%s2 + $0xd8] sm:$0xff]
    %v67 = vld [vmem:[%s2 + $0xe0] sm:$0xff]
    %v68 = vld [vmem:[%s2 + $0xe8] sm:$0xff]
    %v69 = vld [vmem:[%s2 + $0xf0] sm:$0xff]
    %v70 = vld [vmem:[%s2 + $0xf8] sm:$0xff]
    %71 = vst.msk [vmem:[%s10] sm:$0xff] %vm37, %v39
    %72 = vst.msk [vmem:[%s10 + $0x8] sm:$0xff] %vm37, %v40
    %73 = vst.msk [vmem:[%s10 + $0x10] sm:$0xff] %vm37, %v41
    %74 = vst.msk [vmem:[%s10 + $0x18] sm:$0xff] %vm37, %v42
    %75 = vst.msk [vmem:[%s10 + $0x20] sm:$0xff] %vm37, %v43
    %76 = vst.msk [vmem:[%s10 + $0x28] sm:$0xff] %vm37, %v44
    %77 = vst.msk [vmem:[%s10 + $0x30] sm:$0xff] %vm37, %v45
    %78 = vst.msk [vmem:[%s10 + $0x38] sm:$0xff] %vm37, %v46
    %79 = vst.msk [vmem:[%s10 + $0x40] sm:$0xff] %vm37, %v47
    %80 = vst.msk [vmem:[%s10 + $0x48] sm:$0xff] %vm37, %v48
    %81 = vst.msk [vmem:[%s10 + $0x50] sm:$0xff] %vm37, %v49
    %82 = vst.msk [vmem:[%s10 + $0x58] sm:$0xff] %vm37, %v50
    %83 = vst.msk [vmem:[%s10 + $0x60] sm:$0xff] %vm37, %v51
    %84 = vst.msk [vmem:[%s10 + $0x68] sm:$0xff] %vm37, %v52
    %85 = vst.msk [vmem:[%s10 + $0x70] sm:$0xff] %vm37, %v53
    %86 = vst.msk [vmem:[%s10 + $0x78] sm:$0xff] %vm37, %v54
    %87 = vst.msk [vmem:[%s10 + $0x80] sm:$0xff] %vm37, %v55
    %88 = vst.msk [vmem:[%s10 + $0x88] sm:$0xff] %vm37, %v56
    %89 = vst.msk [vmem:[%s10 + $0x90] sm:$0xff] %vm37, %v57
    %90 = vst.msk [vmem:[%s10 + $0x98] sm:$0xff] %vm37, %v58
    %91 = vst.msk [vmem:[%s10 + $0xa0] sm:$0xff] %vm37, %v59
    %92 = vst.msk [vmem:[%s10 + $0xa8] sm:$0xff] %vm37, %v60
    %93 = vst.msk [vmem:[%s10 + $0xb0] sm:$0xff] %vm37, %v61
    %94 = vst.msk [vmem:[%s10 + $0xb8] sm:$0xff] %vm37, %v62
    %95 = vst.msk [vmem:[%s10 + $0xc0] sm:$0xff] %vm37, %v63
    %96 = vst.msk [vmem:[%s10 + $0xc8] sm:$0xff] %vm37, %v64
    %97 = vst.msk [vmem:[%s10 + $0xd0] sm:$0xff] %vm37, %v65
    %98 = vst.msk [vmem:[%s10 + $0xd8] sm:$0xff] %vm37, %v66
    %99 = vst.msk [vmem:[%s10 + $0xe0] sm:$0xff] %vm37, %v67
    %100 = vst.msk [vmem:[%s10 + $0xe8] sm:$0xff] %vm37, %v68
    %101 = vst.msk [vmem:[%s10 + $0xf0] sm:$0xff] %vm37, %v69
    %102 = vst.msk [vmem:[%s10 + $0xf8] sm:$0xff] %vm37, %v70
  $region37: #{network_rollout.1} parent=0 // pred_fallthru
    _
  %v103 = vld [vmem:[%s3] sm:$0xff]
  %v104 = vld [vmem:[%s3 + $0x8] sm:$0xff]
  %v105 = vld [vmem:[%s4] sm:$0xff]
  %v106 = vld [vmem:[%s4 + $0x8] sm:$0xff]
  %v107 = vld [vmem:[%s4 + $0x10] sm:$0xff]
  %v108 = vld [vmem:[%s4 + $0x18] sm:$0xff]
  %v109 = vld [vmem:[%s4 + $0x20] sm:$0xff]
  %v110 = vld [vmem:[%s4 + $0x28] sm:$0xff]
  %v111 = vld [vmem:[%s4 + $0x30] sm:$0xff]
  %v112 = vld [vmem:[%s4 + $0x38] sm:$0xff]
  %v113 = vld [vmem:[%s5] sm:$0x1]
  %v114 = vld [vmem:[%s5 + $0x1] sm:$0x1]
  %v115 = vld [vmem:[%s5 + $0x2] sm:$0x1]
  %v116 = vld [vmem:[%s5 + $0x3] sm:$0x1]
  %v117 = vld [vmem:[%s5 + $0x4] sm:$0x1]
  %v118 = vld [vmem:[%s9] sm:$0xff]
  %v119 = vld [vmem:[%s10] sm:$0xff]
  %v120 = vld [vmem:[%s10 + $0x8] sm:$0xff]
  %v121 = vld [vmem:[%s10 + $0x10] sm:$0xff]
  %v122 = vld [vmem:[%s10 + $0x18] sm:$0xff]
  %v123 = vld [vmem:[%s10 + $0x20] sm:$0xff]
  %v124 = vld [vmem:[%s10 + $0x28] sm:$0xff]
  %v125 = vld [vmem:[%s10 + $0x30] sm:$0xff]
  %v126 = vld [vmem:[%s10 + $0x38] sm:$0xff]
  %v127 = vld [vmem:[%s10 + $0x40] sm:$0xff]
  %v128 = vld [vmem:[%s10 + $0x48] sm:$0xff]
  %v129 = vld [vmem:[%s10 + $0x50] sm:$0xff]
  %v130 = vld [vmem:[%s10 + $0x58] sm:$0xff]
  %v131 = vld [vmem:[%s10 + $0x60] sm:$0xff]
  %v132 = vld [vmem:[%s10 + $0x68] sm:$0xff]
  %v133 = vld [vmem:[%s10 + $0x70] sm:$0xff]
  %v134 = vld [vmem:[%s10 + $0x78] sm:$0xff]
  %v135 = vld [vmem:[%s10 + $0x80] sm:$0xff]
  %v136 = vld [vmem:[%s10 + $0x88] sm:$0xff]
  %v137 = vld [vmem:[%s10 + $0x90] sm:$0xff]
  %v138 = vld [vmem:[%s10 + $0x98] sm:$0xff]
  %v139 = vld [vmem:[%s10 + $0xa0] sm:$0xff]
  %v140 = vld [vmem:[%s10 + $0xa8] sm:$0xff]
  %v141 = vld [vmem:[%s10 + $0xb0] sm:$0xff]
  %v142 = vld [vmem:[%s10 + $0xb8] sm:$0xff]
  %v143 = vld [vmem:[%s10 + $0xc0] sm:$0xff]
  %v144 = vld [vmem:[%s10 + $0xc8] sm:$0xff]
  %v145 = vld [vmem:[%s10 + $0xd0] sm:$0xff]
  %v146 = vld [vmem:[%s10 + $0xd8] sm:$0xff]
  %v147 = vld [vmem:[%s10 + $0xe0] sm:$0xff]
  %v148 = vld [vmem:[%s10 + $0xe8] sm:$0xff]
  %v149 = vld [vmem:[%s10 + $0xf0] sm:$0xff]
  %v150 = vld [vmem:[%s10 + $0xf8] sm:$0xff]
  %v151 = vld [vmem:[%s0] sm:$0xff]
  %v152 = vlaneseq
  %v153 = vshrl.u32 %v152, 7
  %v154 = vsub.s32 0, %v153
  %v155 = vrot.slane %v113, %v154
  %vm156 = vcmask 130048
  %v158 = vsel %vm156, %v151, 0
  %160 = vmatprep.subr.mxu0 0.0
  %161 = vmatpush1.msra.mxu0 %v103
  %162 = vmatprep.subr.mxu0 0.0
  %163 = vmatpush1.msra.mxu0 %v104
  %164 = vmatprep.subr.mxu0 0.0
  %165 = vmatpush1.msra.mxu0 0.0
  %166 = vmatprep.subr.mxu0 0.0
  %167 = vmatpush1.msra.mxu0 0.0
  %168 = vmatprep.subr.mxu0 0.0
  %169 = vmatpush1.msra.mxu0 0.0
  %170 = vmatprep.subr.mxu0 0.0
  %171 = vmatpush1.msra.mxu0 0.0
  %172 = vmatprep.subr.mxu0 0.0
  %173 = vmatpush1.msra.mxu0 0.0
  %174 = vmatprep.subr.mxu0 0.0
  %175 = vmatpush1.msra.mxu0 0.0
  %176 = vmatprep.subr.mxu0 0.0
  %177 = vmatpush1.msra.mxu0 0.0
  %178 = vmatprep.subr.mxu0 0.0
  %179 = vmatpush1.msra.mxu0 0.0
  %180 = vmatprep.subr.mxu0 0.0
  %181 = vmatpush1.msra.mxu0 0.0
  %182 = vmatprep.subr.mxu0 0.0
  %183 = vmatpush1.msra.mxu0 0.0
  %184 = vmatprep.subr.mxu0 0.0
  %185 = vmatpush1.msra.mxu0 0.0
  %186 = vmatprep.subr.mxu0 0.0
  %187 = vmatpush1.msra.mxu0 0.0
  %188 = vmatprep.subr.mxu0 0.0
  %189 = vmatpush1.msra.mxu0 0.0
  %190 = vmatprep.subr.mxu0 0.0
  %191 = vmatpush1.msra.mxu0 0.0
  %192 = vmatprep.subr.mxu0 0.0
  %193 = vmatpush1.msra.mxu0 0.0
  %194 = vmatprep.subr.mxu0 0.0
  %195 = vmatpush1.msra.mxu0 0.0
  %196 = vmatprep.subr.mxu0 0.0
  %197 = vmatpush1.msra.mxu0 0.0
  %198 = vmatprep.subr.mxu0 0.0
  %199 = vmatpush1.msra.mxu0 0.0
  %200 = vmatprep.subr.mxu0 0.0
  %201 = vmatpush1.msra.mxu0 0.0
  %202 = vmatprep.subr.mxu0 0.0
  %203 = vmatpush1.msra.mxu0 0.0
  %204 = vmatprep.subr.mxu0 0.0
  %205 = vmatpush1.msra.mxu0 0.0
  %206 = vmatprep.subr.mxu0 0.0
  %207 = vmatpush1.msra.mxu0 0.0
  %208 = vmatprep.subr.mxu0 0.0
  %209 = vmatpush1.msra.mxu0 0.0
  %210 = vmatprep.subr.mxu0 0.0
  %211 = vmatpush1.msra.mxu0 0.0
  %212 = vmatprep.subr.mxu0 0.0
  %213 = vmatpush1.msra.mxu0 0.0
  %214 = vmatprep.subr.mxu0 0.0
  %215 = vmatpush1.msra.mxu0 0.0
  %216 = vmatprep.subr.mxu0 0.0
  %217 = vmatpush1.msra.mxu0 0.0
  %218 = vmatprep.subr.mxu0 0.0
  %219 = vmatpush1.msra.mxu0 0.0
  %220 = vmatprep.subr.mxu0 0.0
  %221 = vmatpush1.msra.mxu0 0.0
  %222 = vmatprep.subr.mxu0 0.0
  %223 = vmatpush1.msra.mxu0 0.0
  %224 = vmatprep.mubr.f32.mxu0 0.0
  %225 = vmatmul.mubr.f32.gmra.mrb[0].mxu0 %v158
  %v226 = vpop.f32.mrb[0].mxu0
  %v227 = vadd.f32 %v155, %v226
  %v228 = vpop.f32.mrb[0].mxu0
  %229 = vdwg.mxu0
  %vm230 = vcmask 261120
  %v232 = vsel %vm230, %v118, 0
  %234 = vmatprep.subr.mxu0 0.0
  %235 = vmatpush1.msra.mxu0 %v105
  %236 = vmatprep.subr.mxu0 0.0
  %237 = vmatpush1.msra.mxu0 %v106
  %238 = vmatprep.subr.mxu0 0.0
  %239 = vmatpush1.msra.mxu0 %v107
  %240 = vmatprep.subr.mxu0 0.0
  %241 = vmatpush1.msra.mxu0 %v108
  %242 = vmatprep.subr.mxu0 0.0
  %243 = vmatpush1.msra.mxu0 0.0
  %244 = vmatprep.subr.mxu0 0.0
  %245 = vmatpush1.msra.mxu0 0.0
  %246 = vmatprep.subr.mxu0 0.0
  %247 = vmatpush1.msra.mxu0 0.0
  %248 = vmatprep.subr.mxu0 0.0
  %249 = vmatpush1.msra.mxu0 0.0
  %250 = vmatprep.subr.mxu0 0.0
  %251 = vmatpush1.msra.mxu0 0.0
  %252 = vmatprep.subr.mxu0 0.0
  %253 = vmatpush1.msra.mxu0 0.0
  %254 = vmatprep.subr.mxu0 0.0
  %255 = vmatpush1.msra.mxu0 0.0
  %256 = vmatprep.subr.mxu0 0.0
  %257 = vmatpush1.msra.mxu0 0.0
  %258 = vmatprep.subr.mxu0 0.0
  %259 = vmatpush1.msra.mxu0 0.0
  %260 = vmatprep.subr.mxu0 0.0
  %261 = vmatpush1.msra.mxu0 0.0
  %262 = vmatprep.subr.mxu0 0.0
  %263 = vmatpush1.msra.mxu0 0.0
  %264 = vmatprep.subr.mxu0 0.0
  %265 = vmatpush1.msra.mxu0 0.0
  %266 = vmatprep.subr.mxu0 0.0
  %267 = vmatpush1.msra.mxu0 0.0
  %268 = vmatprep.subr.mxu0 0.0
  %269 = vmatpush1.msra.mxu0 0.0
  %270 = vmatprep.subr.mxu0 0.0
  %271 = vmatpush1.msra.mxu0 0.0
  %272 = vmatprep.subr.mxu0 0.0
  %273 = vmatpush1.msra.mxu0 0.0
  %274 = vmatprep.subr.mxu0 0.0
  %275 = vmatpush1.msra.mxu0 0.0
  %276 = vmatprep.subr.mxu0 0.0
  %277 = vmatpush1.msra.mxu0 0.0
  %278 = vmatprep.subr.mxu0 0.0
  %279 = vmatpush1.msra.mxu0 0.0
  %280 = vmatprep.subr.mxu0 0.0
  %281 = vmatpush1.msra.mxu0 0.0
  %282 = vmatprep.subr.mxu0 0.0
  %283 = vmatpush1.msra.mxu0 0.0
  %284 = vmatprep.subr.mxu0 0.0
  %285 = vmatpush1.msra.mxu0 0.0
  %286 = vmatprep.subr.mxu0 0.0
  %287 = vmatpush1.msra.mxu0 0.0
  %288 = vmatprep.subr.mxu0 0.0
  %289 = vmatpush1.msra.mxu0 0.0
  %290 = vmatprep.subr.mxu0 0.0
  %291 = vmatpush1.msra.mxu0 0.0
  %292 = vmatprep.subr.mxu0 0.0
  %293 = vmatpush1.msra.mxu0 0.0
  %294 = vmatprep.subr.mxu0 0.0
  %295 = vmatpush1.msra.mxu0 0.0
  %296 = vmatprep.subr.mxu0 0.0
  %297 = vmatpush1.msra.mxu0 0.0
  %298 = vmatprep.mubr.f32.mxu0 0.0
  %299 = vmatmul.mubr.f32.gmra.mrb[0].mxu0 %v232
  %v300 = vpop.f32.mrb[0].mxu0
  %v301 = vadd.f32 0.0, %v300
  %v302 = vpop.f32.mrb[0].mxu0
  %303 = vdwg.mxu0
  %v304 = vadd.f32 %v227, %v301
  %v305 = vlaneseq
  %v306 = vshrl.u32 %v305, 7
  %v307 = vsub.s32 0, %v306
  %v308 = vrot.slane %v118, %v307
  %310 = vbcast.lane.b32.xlu0 %v308, 256
  %v311 = vpop.permute.xlu0 %310
  %s313 = sor.u32 256, 8
  %314 = vbcast.lane.b32.xlu0 %v308, %s313
  %v315 = vpop.permute.xlu0 %314
  %s317 = sor.u32 256, 16
  %318 = vbcast.lane.b32.xlu0 %v308, %s317
  %v319 = vpop.permute.xlu0 %318
  %s321 = sor.u32 256, 24
  %322 = vbcast.lane.b32.xlu0 %v308, %s321
  %v323 = vpop.permute.xlu0 %322
  %v324 = vlaneseq
  %v325 = vshrl.u32 %v324, 7
  %v326 = vsub.s32 1, %v325
  %v327 = vrot.slane %v118, %v326
  %329 = vbcast.lane.b32.xlu0 %v327, 256
  %v330 = vpop.permute.xlu0 %329
  %s332 = sor.u32 256, 8
  %333 = vbcast.lane.b32.xlu0 %v327, %s332
  %v334 = vpop.permute.xlu0 %333
  %s336 = sor.u32 256, 16
  %337 = vbcast.lane.b32.xlu0 %v327, %s336
  %v338 = vpop.permute.xlu0 %337
  %s340 = sor.u32 256, 24
  %341 = vbcast.lane.b32.xlu0 %v327, %s340
  %v342 = vpop.permute.xlu0 %341
  %v343 = vlaneseq
  %v344 = vshrl.u32 %v343, 7
  %v345 = vsub.s32 2, %v344
  %v346 = vrot.slane %v118, %v345
  %348 = vbcast.lane.b32.xlu0 %v346, 256
  %v349 = vpop.permute.xlu0 %348
  %s351 = sor.u32 256, 8
  %352 = vbcast.lane.b32.xlu0 %v346, %s351
  %v353 = vpop.permute.xlu0 %352
  %s355 = sor.u32 256, 16
  %356 = vbcast.lane.b32.xlu0 %v346, %s355
  %v357 = vpop.permute.xlu0 %356
  %s359 = sor.u32 256, 24
  %360 = vbcast.lane.b32.xlu0 %v346, %s359
  %v361 = vpop.permute.xlu0 %360
  %v362 = vlaneseq
  %v363 = vshrl.u32 %v362, 7
  %v364 = vsub.s32 3, %v363
  %v365 = vrot.slane %v118, %v364
  %367 = vbcast.lane.b32.xlu0 %v365, 256
  %v368 = vpop.permute.xlu0 %367
  %s370 = sor.u32 256, 8
  %371 = vbcast.lane.b32.xlu0 %v365, %s370
  %v372 = vpop.permute.xlu0 %371
  %s374 = sor.u32 256, 16
  %375 = vbcast.lane.b32.xlu0 %v365, %s374
  %v376 = vpop.permute.xlu0 %375
  %s378 = sor.u32 256, 24
  %379 = vbcast.lane.b32.xlu0 %v365, %s378
  %v380 = vpop.permute.xlu0 %379
  %v381 = vlaneseq
  %v382 = vshrl.u32 %v381, 7
  %v383 = vsub.s32 4, %v382
  %v384 = vrot.slane %v118, %v383
  %386 = vbcast.lane.b32.xlu0 %v384, 256
  %v387 = vpop.permute.xlu0 %386
  %s389 = sor.u32 256, 8
  %390 = vbcast.lane.b32.xlu0 %v384, %s389
  %v391 = vpop.permute.xlu0 %390
  %s393 = sor.u32 256, 16
  %394 = vbcast.lane.b32.xlu0 %v384, %s393
  %v395 = vpop.permute.xlu0 %394
  %s397 = sor.u32 256, 24
  %398 = vbcast.lane.b32.xlu0 %v384, %s397
  %v399 = vpop.permute.xlu0 %398
  %v400 = vlaneseq
  %v401 = vshrl.u32 %v400, 7
  %v402 = vsub.s32 5, %v401
  %v403 = vrot.slane %v118, %v402
  %405 = vbcast.lane.b32.xlu0 %v403, 256
  %v406 = vpop.permute.xlu0 %405
  %s408 = sor.u32 256, 8
  %409 = vbcast.lane.b32.xlu0 %v403, %s408
  %v410 = vpop.permute.xlu0 %409
  %s412 = sor.u32 256, 16
  %413 = vbcast.lane.b32.xlu0 %v403, %s412
  %v414 = vpop.permute.xlu0 %413
  %s416 = sor.u32 256, 24
  %417 = vbcast.lane.b32.xlu0 %v403, %s416
  %v418 = vpop.permute.xlu0 %417
  %v419 = vlaneseq
  %v420 = vshrl.u32 %v419, 7
  %v421 = vsub.s32 6, %v420
  %v422 = vrot.slane %v118, %v421
  %424 = vbcast.lane.b32.xlu0 %v422, 256
  %v425 = vpop.permute.xlu0 %424
  %s427 = sor.u32 256, 8
  %428 = vbcast.lane.b32.xlu0 %v422, %s427
  %v429 = vpop.permute.xlu0 %428
  %s431 = sor.u32 256, 16
  %432 = vbcast.lane.b32.xlu0 %v422, %s431
  %v433 = vpop.permute.xlu0 %432
  %s435 = sor.u32 256, 24
  %436 = vbcast.lane.b32.xlu0 %v422, %s435
  %v437 = vpop.permute.xlu0 %436
  %v438 = vlaneseq
  %v439 = vshrl.u32 %v438, 7
  %v440 = vsub.s32 7, %v439
  %v441 = vrot.slane %v118, %v440
  %443 = vbcast.lane.b32.xlu0 %v441, 256
  %v444 = vpop.permute.xlu0 %443
  %s446 = sor.u32 256, 8
  %447 = vbcast.lane.b32.xlu0 %v441, %s446
  %v448 = vpop.permute.xlu0 %447
  %s450 = sor.u32 256, 16
  %451 = vbcast.lane.b32.xlu0 %v441, %s450
  %v452 = vpop.permute.xlu0 %451
  %s454 = sor.u32 256, 24
  %455 = vbcast.lane.b32.xlu0 %v441, %s454
  %v456 = vpop.permute.xlu0 %455
  %v457 = vmul.f32 %v311, %v109
  %v458 = vmul.f32 %v315, %v110
  %v459 = vmul.f32 %v319, %v111
  %v460 = vmul.f32 %v323, %v112
  %v461 = vmul.f32 %v330, %v109
  %v462 = vmul.f32 %v334, %v110
  %v463 = vmul.f32 %v338, %v111
  %v464 = vmul.f32 %v342, %v112
  %v465 = vmul.f32 %v349, %v109
  %v466 = vmul.f32 %v353, %v110
  %v467 = vmul.f32 %v357, %v111
  %v468 = vmul.f32 %v361, %v112
  %v469 = vmul.f32 %v368, %v109
  %v470 = vmul.f32 %v372, %v110
  %v471 = vmul.f32 %v376, %v111
  %v472 = vmul.f32 %v380, %v112
  %v473 = vmul.f32 %v387, %v109
  %v474 = vmul.f32 %v391, %v110
  %v475 = vmul.f32 %v395, %v111
  %v476 = vmul.f32 %v399, %v112
  %v477 = vmul.f32 %v406, %v109
  %v478 = vmul.f32 %v410, %v110
  %v479 = vmul.f32 %v414, %v111
  %v480 = vmul.f32 %v418, %v112
  %v481 = vmul.f32 %v425, %v109
  %v482 = vmul.f32 %v429, %v110
  %v483 = vmul.f32 %v433, %v111
  %v484 = vmul.f32 %v437, %v112
  %v485 = vmul.f32 %v444, %v109
  %v486 = vmul.f32 %v448, %v110
  %v487 = vmul.f32 %v452, %v111
  %v488 = vmul.f32 %v456, %v112
  %v489 = vmul.f32 %v457, %v119
  %v490 = vmul.f32 %v458, %v120
  %v491 = vmul.f32 %v459, %v121
  %v492 = vmul.f32 %v460, %v122
  %v493 = vmul.f32 %v461, %v123
  %v494 = vmul.f32 %v462, %v124
  %v495 = vmul.f32 %v463, %v125
  %v496 = vmul.f32 %v464, %v126
  %v497 = vmul.f32 %v465, %v127
  %v498 = vmul.f32 %v466, %v128
  %v499 = vmul.f32 %v467, %v129
  %v500 = vmul.f32 %v468, %v130
  %v501 = vmul.f32 %v469, %v131
  %v502 = vmul.f32 %v470, %v132
  %v503 = vmul.f32 %v471, %v133
  %v504 = vmul.f32 %v472, %v134
  %v505 = vmul.f32 %v473, %v135
  %v506 = vmul.f32 %v474, %v136
  %v507 = vmul.f32 %v475, %v137
  %v508 = vmul.f32 %v476, %v138
  %v509 = vmul.f32 %v477, %v139
  %v510 = vmul.f32 %v478, %v140
  %v511 = vmul.f32 %v479, %v141
  %v512 = vmul.f32 %v480, %v142
  %v513 = vmul.f32 %v481, %v143
  %v514 = vmul.f32 %v482, %v144
  %v515 = vmul.f32 %v483, %v145
  %v516 = vmul.f32 %v484, %v146
  %v517 = vmul.f32 %v485, %v147
  %v518 = vmul.f32 %v486, %v148
  %v519 = vmul.f32 %v487, %v149
  %v520 = vmul.f32 %v488, %v150
  %v521 = vsel %vm230, %v489, 0.0
  %v522 = vsel %vm230, %v490, 0.0
  %v523 = vadd.f32 %v521, %v522
  %v524 = vsel %vm230, %v491, 0.0
  %v525 = vadd.f32 %v523, %v524
  %v526 = vsel %vm230, %v492, 0.0
  %v527 = vadd.f32 %v525, %v526
  %v528 = vrot.slane %v527, 4
  %v529 = vadd.f32 %v527, %v528
  %v530 = vrot.slane %v529, 2
  %v531 = vadd.f32 %v529, %v530
  %v532 = vrot.slane %v531, 1
  %v533 = vadd.f32 %v531, %v532
  %v534 = vsel %vm230, %v493, 0.0
  %v535 = vsel %vm230, %v494, 0.0
  %v536 = vadd.f32 %v534, %v535
  %v537 = vsel %vm230, %v495, 0.0
  %v538 = vadd.f32 %v536, %v537
  %v539 = vsel %vm230, %v496, 0.0
  %v540 = vadd.f32 %v538, %v539
  %v541 = vrot.slane %v540, 4
  %v542 = vadd.f32 %v540, %v541
  %v543 = vrot.slane %v542, 2
  %v544 = vadd.f32 %v542, %v543
  %v545 = vrot.slane %v544, 1
  %v546 = vadd.f32 %v544, %v545
  %v547 = vsel %vm230, %v497, 0.0
  %v548 = vsel %vm230, %v498, 0.0
  %v549 = vadd.f32 %v547, %v548
  %v550 = vsel %vm230, %v499, 0.0
  %v551 = vadd.f32 %v549, %v550
  %v552 = vsel %vm230, %v500, 0.0
  %v553 = vadd.f32 %v551, %v552
  %v554 = vrot.slane %v553, 4
  %v555 = vadd.f32 %v553, %v554
  %v556 = vrot.slane %v555, 2
  %v557 = vadd.f32 %v555, %v556
  %v558 = vrot.slane %v557, 1
  %v559 = vadd.f32 %v557, %v558
  %v560 = vsel %vm230, %v501, 0.0
  %v561 = vsel %vm230, %v502, 0.0
  %v562 = vadd.f32 %v560, %v561
  %v563 = vsel %vm230, %v503, 0.0
  %v564 = vadd.f32 %v562, %v563
  %v565 = vsel %vm230, %v504, 0.0
  %v566 = vadd.f32 %v564, %v565
  %v567 = vrot.slane %v566, 4
  %v568 = vadd.f32 %v566, %v567
  %v569 = vrot.slane %v568, 2
  %v570 = vadd.f32 %v568, %v569
  %v571 = vrot.slane %v570, 1
  %v572 = vadd.f32 %v570, %v571
  %v573 = vsel %vm230, %v505, 0.0
  %v574 = vsel %vm230, %v506, 0.0
  %v575 = vadd.f32 %v573, %v574
  %v576 = vsel %vm230, %v507, 0.0
  %v577 = vadd.f32 %v575, %v576
  %v578 = vsel %vm230, %v508, 0.0
  %v579 = vadd.f32 %v577, %v578
  %v580 = vrot.slane %v579, 4
  %v581 = vadd.f32 %v579, %v580
  %v582 = vrot.slane %v581, 2
  %v583 = vadd.f32 %v581, %v582
  %v584 = vrot.slane %v583, 1
  %v585 = vadd.f32 %v583, %v584
  %v586 = vsel %vm230, %v509, 0.0
  %v587 = vsel %vm230, %v510, 0.0
  %v588 = vadd.f32 %v586, %v587
  %v589 = vsel %vm230, %v511, 0.0
  %v590 = vadd.f32 %v588, %v589
  %v591 = vsel %vm230, %v512, 0.0
  %v592 = vadd.f32 %v590, %v591
  %v593 = vrot.slane %v592, 4
  %v594 = vadd.f32 %v592, %v593
  %v595 = vrot.slane %v594, 2
  %v596 = vadd.f32 %v594, %v595
  %v597 = vrot.slane %v596, 1
  %v598 = vadd.f32 %v596, %v597
  %v599 = vsel %vm230, %v513, 0.0
  %v600 = vsel %vm230, %v514, 0.0
  %v601 = vadd.f32 %v599, %v600
  %v602 = vsel %vm230, %v515, 0.0
  %v603 = vadd.f32 %v601, %v602
  %v604 = vsel %vm230, %v516, 0.0
  %v605 = vadd.f32 %v603, %v604
  %v606 = vrot.slane %v605, 4
  %v607 = vadd.f32 %v605, %v606
  %v608 = vrot.slane %v607, 2
  %v609 = vadd.f32 %v607, %v608
  %v610 = vrot.slane %v609, 1
  %v611 = vadd.f32 %v609, %v610
  %v612 = vsel %vm230, %v517, 0.0
  %v613 = vsel %vm230, %v518, 0.0
  %v614 = vadd.f32 %v612, %v613
  %v615 = vsel %vm230, %v519, 0.0
  %v616 = vadd.f32 %v614, %v615
  %v617 = vsel %vm230, %v520, 0.0
  %v618 = vadd.f32 %v616, %v617
  %v619 = vrot.slane %v618, 4
  %v620 = vadd.f32 %v618, %v619
  %v621 = vrot.slane %v620, 2
  %v622 = vadd.f32 %v620, %v621
  %v623 = vrot.slane %v622, 1
  %v624 = vadd.f32 %v622, %v623
  %vm633 = vcmask 1041409
  %v634 = vsel %vm633, %v546, %v533
  %vm635 = vcmask 1042434
  %v636 = vsel %vm635, %v559, %v634
  %vm637 = vcmask 1043459
  %v638 = vsel %vm637, %v572, %v636
  %vm639 = vcmask 1044484
  %v640 = vsel %vm639, %v585, %v638
  %vm641 = vcmask 1045509
  %v642 = vsel %vm641, %v598, %v640
  %vm643 = vcmask 1046534
  %v644 = vsel %vm643, %v611, %v642
  %vm645 = vcmask 1047559
  %v646 = vsel %vm645, %v624, %v644
  %v648 = vadd.f32 %v304, %v646
  %v649 = vtanh.pop %v648
  %650 = vst.msk [vmem:[#allocation2] sm:$0xff] %vm230, %v649
  %v651 = vlaneseq
  %v652 = vshrl.u32 %v651, 7
  %v653 = vsub.s32 0, %v652
  %v654 = vrot.slane %v116, %v653
  %v655 = vmul.f32 %v649, %v654
  %v656 = vsel %vm230, %v655, 0.0
  %657 = vadd.xlane.f32.xlu0 %v656
  %v658 = vpop.xlane.xlu0 %657
  %v659 = vlaneseq
  %v660 = vshrl.u32 %v659, 7
  %v661 = vsub.s32 0, %v660
  %v662 = vrot.slane %v117, %v661
  %v663 = vadd.f32 %v658, %v662
  %v664 = vtanh.pop %v663
  %666 = vset.pattern.permute.xlu0 0
  %667 = vperm.xlu0 %666, %v664
  %v668 = vpop.permute.xlu0 %667
  %v670 = vlaneseq
  %v671 = vshrl.u32 %v670, 7
  %v672 = vsub.s32 0, %v671
  %v673 = vrot.slane %v114, %v672
  %v674 = vmul.f32 %v668, %v673
  %v675 = vlaneseq
  %v676 = vshrl.u32 %v675, 7
  %v677 = vsub.s32 0, %v676
  %v678 = vrot.slane %v115, %v677
  %v679 = vadd.f32 %v674, %v678
  %v680 = vmul.f32 %v679, %v649
  %v682 = vcombine.high %v680, %v680
  %v684 = vunpack.c.l.s4 1966171168
  %v685 = vunpack.c.0.s8 %v684
  %v686 = vlaneseq
  %v687 = vshrl.u32 %v686, 7
  %v688 = vsub.s32 %v685, %v687
  %v689 = vrot.slane %v680, %v688
  %v691 = vunpack.c.l.s4 1966171168
  %v692 = vunpack.c.0.s8 %v691
  %v693 = vlaneseq
  %v694 = vshrl.u32 %v693, 7
  %v695 = vsub.s32 %v692, %v694
  %v696 = vrot.slane %v682, %v695
  %v697 = vcombine.high %v689, %v689
  %v698 = vcombine.high %v696, %v696
  %v700 = vunpack.c.l.s4 1966171168
  %v701 = vunpack.c.0.s8 %v700
  %v702 = vlaneseq
  %v703 = vshrl.u32 %v702, 7
  %v704 = vsub.s32 %v701, %v703
  %v705 = vrot.slane %v689, %v704
  %v707 = vunpack.c.l.s4 1966171168
  %v708 = vunpack.c.0.s8 %v707
  %v709 = vlaneseq
  %v710 = vshrl.u32 %v709, 7
  %v711 = vsub.s32 %v708, %v710
  %v712 = vrot.slane %v696, %v711
  %v714 = vunpack.c.l.s4 1966171168
  %v715 = vunpack.c.0.s8 %v714
  %v716 = vlaneseq
  %v717 = vshrl.u32 %v716, 7
  %v718 = vsub.s32 %v715, %v717
  %v719 = vrot.slane %v697, %v718
  %v721 = vunpack.c.l.s4 1966171168
  %v722 = vunpack.c.0.s8 %v721
  %v723 = vlaneseq
  %v724 = vshrl.u32 %v723, 7
  %v725 = vsub.s32 %v722, %v724
  %v726 = vrot.slane %v698, %v725
  %v727 = vcombine.high %v705, %v705
  %v728 = vcombine.high %v712, %v712
  %v729 = vcombine.high %v719, %v719
  %v730 = vcombine.high %v726, %v726
  %v731 = vlaneseq
  %v732 = vshrl.u32 %v731, 7
  %v733 = vsub.s32 0, %v732
  %v734 = vrot.slane %v705, %v733
  %v735 = vlaneseq
  %v736 = vshrl.u32 %v735, 7
  %v737 = vsub.s32 0, %v736
  %v738 = vrot.slane %v719, %v737
  %v739 = vlaneseq
  %v740 = vshrl.u32 %v739, 7
  %v741 = vsub.s32 0, %v740
  %v742 = vrot.slane %v727, %v741
  %v743 = vlaneseq
  %v744 = vshrl.u32 %v743, 7
  %v745 = vsub.s32 0, %v744
  %v746 = vrot.slane %v729, %v745
  %v747 = vlaneseq
  %v748 = vshrl.u32 %v747, 7
  %v749 = vsub.s32 0, %v748
  %v750 = vrot.slane %v712, %v749
  %v751 = vlaneseq
  %v752 = vshrl.u32 %v751, 7
  %v753 = vsub.s32 0, %v752
  %v754 = vrot.slane %v726, %v753
  %v755 = vlaneseq
  %v756 = vshrl.u32 %v755, 7
  %v757 = vsub.s32 0, %v756
  %v758 = vrot.slane %v728, %v757
  %v759 = vlaneseq
  %v760 = vshrl.u32 %v759, 7
  %v761 = vsub.s32 0, %v760
  %v762 = vrot.slane %v730, %v761
  %v771 = vmul.f32 %v311, %v734
  %v772 = vmul.f32 %v315, %v734
  %v773 = vmul.f32 %v319, %v734
  %v774 = vmul.f32 %v323, %v734
  %v775 = vmul.f32 %v330, %v738
  %v776 = vmul.f32 %v334, %v738
  %v777 = vmul.f32 %v338, %v738
  %v778 = vmul.f32 %v342, %v738
  %v779 = vmul.f32 %v349, %v742
  %v780 = vmul.f32 %v353, %v742
  %v781 = vmul.f32 %v357, %v742
  %v782 = vmul.f32 %v361, %v742
  %v783 = vmul.f32 %v368, %v746
  %v784 = vmul.f32 %v372, %v746
  %v785 = vmul.f32 %v376, %v746
  %v786 = vmul.f32 %v380, %v746
  %v787 = vmul.f32 %v387, %v750
  %v788 = vmul.f32 %v391, %v750
  %v789 = vmul.f32 %v395, %v750
  %v790 = vmul.f32 %v399, %v750
  %v791 = vmul.f32 %v406, %v754
  %v792 = vmul.f32 %v410, %v754
  %v793 = vmul.f32 %v414, %v754
  %v794 = vmul.f32 %v418, %v754
  %v795 = vmul.f32 %v425, %v758
  %v796 = vmul.f32 %v429, %v758
  %v797 = vmul.f32 %v433, %v758
  %v798 = vmul.f32 %v437, %v758
  %v799 = vmul.f32 %v444, %v762
  %v800 = vmul.f32 %v448, %v762
  %v801 = vmul.f32 %v452, %v762
  %v802 = vmul.f32 %v456, %v762
  %v803 = vadd.f32 %v119, %v771
  %v804 = vadd.f32 %v120, %v772
  %v805 = vadd.f32 %v121, %v773
  %v806 = vadd.f32 %v122, %v774
  %v807 = vadd.f32 %v123, %v775
  %v808 = vadd.f32 %v124, %v776
  %v809 = vadd.f32 %v125, %v777
  %v810 = vadd.f32 %v126, %v778
  %v811 = vadd.f32 %v127, %v779
  %v812 = vadd.f32 %v128, %v780
  %v813 = vadd.f32 %v129, %v781
  %v814 = vadd.f32 %v130, %v782
  %v815 = vadd.f32 %v131, %v783
  %v816 = vadd.f32 %v132, %v784
  %v817 = vadd.f32 %v133, %v785
  %v818 = vadd.f32 %v134, %v786
  %v819 = vadd.f32 %v135, %v787
  %v820 = vadd.f32 %v136, %v788
  %v821 = vadd.f32 %v137, %v789
  %v822 = vadd.f32 %v138, %v790
  %v823 = vadd.f32 %v139, %v791
  %v824 = vadd.f32 %v140, %v792
  %v825 = vadd.f32 %v141, %v793
  %v826 = vadd.f32 %v142, %v794
  %v827 = vadd.f32 %v143, %v795
  %v828 = vadd.f32 %v144, %v796
  %v829 = vadd.f32 %v145, %v797
  %v830 = vadd.f32 %v146, %v798
  %v831 = vadd.f32 %v147, %v799
  %v832 = vadd.f32 %v148, %v800
  %v833 = vadd.f32 %v149, %v801
  %v834 = vadd.f32 %v150, %v802
  %v835 = vmax.f32 %v803, -2.0
  %v836 = vmax.f32 %v804, -2.0
  %v837 = vmax.f32 %v805, -2.0
  %v838 = vmax.f32 %v806, -2.0
  %v839 = vmax.f32 %v807, -2.0
  %v840 = vmax.f32 %v808, -2.0
  %v841 = vmax.f32 %v809, -2.0
  %v842 = vmax.f32 %v810, -2.0
  %v843 = vmax.f32 %v811, -2.0
  %v844 = vmax.f32 %v812, -2.0
  %v845 = vmax.f32 %v813, -2.0
  %v846 = vmax.f32 %v814, -2.0
  %v847 = vmax.f32 %v815, -2.0
  %v848 = vmax.f32 %v816, -2.0
  %v849 = vmax.f32 %v817, -2.0
  %v850 = vmax.f32 %v818, -2.0
  %v851 = vmax.f32 %v819, -2.0
  %v852 = vmax.f32 %v820, -2.0
  %v853 = vmax.f32 %v821, -2.0
  %v854 = vmax.f32 %v822, -2.0
  %v855 = vmax.f32 %v823, -2.0
  %v856 = vmax.f32 %v824, -2.0
  %v857 = vmax.f32 %v825, -2.0
  %v858 = vmax.f32 %v826, -2.0
  %v859 = vmax.f32 %v827, -2.0
  %v860 = vmax.f32 %v828, -2.0
  %v861 = vmax.f32 %v829, -2.0
  %v862 = vmax.f32 %v830, -2.0
  %v863 = vmax.f32 %v831, -2.0
  %v864 = vmax.f32 %v832, -2.0
  %v865 = vmax.f32 %v833, -2.0
  %v866 = vmax.f32 %v834, -2.0
  %v867 = vmin.f32 %v835, 2.0
  %v868 = vmin.f32 %v836, 2.0
  %v869 = vmin.f32 %v837, 2.0
  %v870 = vmin.f32 %v838, 2.0
  %v871 = vmin.f32 %v839, 2.0
  %v872 = vmin.f32 %v840, 2.0
  %v873 = vmin.f32 %v841, 2.0
  %v874 = vmin.f32 %v842, 2.0
  %v875 = vmin.f32 %v843, 2.0
  %v876 = vmin.f32 %v844, 2.0
  %v877 = vmin.f32 %v845, 2.0
  %v878 = vmin.f32 %v846, 2.0
  %v879 = vmin.f32 %v847, 2.0
  %v880 = vmin.f32 %v848, 2.0
  %v881 = vmin.f32 %v849, 2.0
  %v882 = vmin.f32 %v850, 2.0
  %v883 = vmin.f32 %v851, 2.0
  %v884 = vmin.f32 %v852, 2.0
  %v885 = vmin.f32 %v853, 2.0
  %v886 = vmin.f32 %v854, 2.0
  %v887 = vmin.f32 %v855, 2.0
  %v888 = vmin.f32 %v856, 2.0
  %v889 = vmin.f32 %v857, 2.0
  %v890 = vmin.f32 %v858, 2.0
  %v891 = vmin.f32 %v859, 2.0
  %v892 = vmin.f32 %v860, 2.0
  %v893 = vmin.f32 %v861, 2.0
  %v894 = vmin.f32 %v862, 2.0
  %v895 = vmin.f32 %v863, 2.0
  %v896 = vmin.f32 %v864, 2.0
  %v897 = vmin.f32 %v865, 2.0
  %v898 = vmin.f32 %v866, 2.0
  %899 = vst.msk [vmem:[%s9] sm:$0xff] %vm230, %v649
  %900 = vst.msk [vmem:[%s10] sm:$0xff] %vm230, %v867
  %901 = vst.msk [vmem:[%s10 + $0x8] sm:$0xff] %vm230, %v868
  %902 = vst.msk [vmem:[%s10 + $0x10] sm:$0xff] %vm230, %v869
  %903 = vst.msk [vmem:[%s10 + $0x18] sm:$0xff] %vm230, %v870
  %904 = vst.msk [vmem:[%s10 + $0x20] sm:$0xff] %vm230, %v871
  %905 = vst.msk [vmem:[%s10 + $0x28] sm:$0xff] %vm230, %v872
  %906 = vst.msk [vmem:[%s10 + $0x30] sm:$0xff] %vm230, %v873
  %907 = vst.msk [vmem:[%s10 + $0x38] sm:$0xff] %vm230, %v874
  %908 = vst.msk [vmem:[%s10 + $0x40] sm:$0xff] %vm230, %v875
  %909 = vst.msk [vmem:[%s10 + $0x48] sm:$0xff] %vm230, %v876
  %910 = vst.msk [vmem:[%s10 + $0x50] sm:$0xff] %vm230, %v877
  %911 = vst.msk [vmem:[%s10 + $0x58] sm:$0xff] %vm230, %v878
  %912 = vst.msk [vmem:[%s10 + $0x60] sm:$0xff] %vm230, %v879
  %913 = vst.msk [vmem:[%s10 + $0x68] sm:$0xff] %vm230, %v880
  %914 = vst.msk [vmem:[%s10 + $0x70] sm:$0xff] %vm230, %v881
  %915 = vst.msk [vmem:[%s10 + $0x78] sm:$0xff] %vm230, %v882
  %916 = vst.msk [vmem:[%s10 + $0x80] sm:$0xff] %vm230, %v883
  %917 = vst.msk [vmem:[%s10 + $0x88] sm:$0xff] %vm230, %v884
  %918 = vst.msk [vmem:[%s10 + $0x90] sm:$0xff] %vm230, %v885
  %919 = vst.msk [vmem:[%s10 + $0x98] sm:$0xff] %vm230, %v886
  %920 = vst.msk [vmem:[%s10 + $0xa0] sm:$0xff] %vm230, %v887
  %921 = vst.msk [vmem:[%s10 + $0xa8] sm:$0xff] %vm230, %v888
  %922 = vst.msk [vmem:[%s10 + $0xb0] sm:$0xff] %vm230, %v889
  %923 = vst.msk [vmem:[%s10 + $0xb8] sm:$0xff] %vm230, %v890
  %924 = vst.msk [vmem:[%s10 + $0xc0] sm:$0xff] %vm230, %v891
  %925 = vst.msk [vmem:[%s10 + $0xc8] sm:$0xff] %vm230, %v892
  %926 = vst.msk [vmem:[%s10 + $0xd0] sm:$0xff] %vm230, %v893
  %927 = vst.msk [vmem:[%s10 + $0xd8] sm:$0xff] %vm230, %v894
  %928 = vst.msk [vmem:[%s10 + $0xe0] sm:$0xff] %vm230, %v895
  %929 = vst.msk [vmem:[%s10 + $0xe8] sm:$0xff] %vm230, %v896
  %930 = vst.msk [vmem:[%s10 + $0xf0] sm:$0xff] %vm230, %v897
  %931 = vst.msk [vmem:[%s10 + $0xf8] sm:$0xff] %vm230, %v898
  %v932 = vld [vmem:[#allocation2] sm:$0xff]
  %v933 = vld [vmem:[%s6] sm:$0xff]
  %v934 = vld [vmem:[%s6 + $0x8] sm:$0xff]
  %v935 = vld [vmem:[%s6 + $0x10] sm:$0xff]
  %v936 = vld [vmem:[%s6 + $0x18] sm:$0xff]
  %v937 = vld [vmem:[%s7] sm:$0x1]
  %v939 = vlaneseq
  %v940 = vshrl.u32 %v939, 7
  %v941 = vsub.s32 0, %v940
  %v942 = vrot.slane %v937, %v941
  %v945 = vsel %vm230, %v932, 0
  %947 = vmatprep.subr.mxu0 0.0
  %948 = vmatpush1.msra.mxu0 %v933
  %949 = vmatprep.subr.mxu0 0.0
  %950 = vmatpush1.msra.mxu0 %v934
  %951 = vmatprep.subr.mxu0 0.0
  %952 = vmatpush1.msra.mxu0 %v935
  %953 = vmatprep.subr.mxu0 0.0
  %954 = vmatpush1.msra.mxu0 %v936
  %955 = vmatprep.subr.mxu0 0.0
  %956 = vmatpush1.msra.mxu0 0.0
  %957 = vmatprep.subr.mxu0 0.0
  %958 = vmatpush1.msra.mxu0 0.0
  %959 = vmatprep.subr.mxu0 0.0
  %960 = vmatpush1.msra.mxu0 0.0
  %961 = vmatprep.subr.mxu0 0.0
  %962 = vmatpush1.msra.mxu0 0.0
  %963 = vmatprep.subr.mxu0 0.0
  %964 = vmatpush1.msra.mxu0 0.0
  %965 = vmatprep.subr.mxu0 0.0
  %966 = vmatpush1.msra.mxu0 0.0
  %967 = vmatprep.subr.mxu0 0.0
  %968 = vmatpush1.msra.mxu0 0.0
  %969 = vmatprep.subr.mxu0 0.0
  %970 = vmatpush1.msra.mxu0 0.0
  %971 = vmatprep.subr.mxu0 0.0
  %972 = vmatpush1.msra.mxu0 0.0
  %973 = vmatprep.subr.mxu0 0.0
  %974 = vmatpush1.msra.mxu0 0.0
  %975 = vmatprep.subr.mxu0 0.0
  %976 = vmatpush1.msra.mxu0 0.0
  %977 = vmatprep.subr.mxu0 0.0
  %978 = vmatpush1.msra.mxu0 0.0
  %979 = vmatprep.subr.mxu0 0.0
  %980 = vmatpush1.msra.mxu0 0.0
  %981 = vmatprep.subr.mxu0 0.0
  %982 = vmatpush1.msra.mxu0 0.0
  %983 = vmatprep.subr.mxu0 0.0
  %984 = vmatpush1.msra.mxu0 0.0
  %985 = vmatprep.subr.mxu0 0.0
  %986 = vmatpush1.msra.mxu0 0.0
  %987 = vmatprep.subr.mxu0 0.0
  %988 = vmatpush1.msra.mxu0 0.0
  %989 = vmatprep.subr.mxu0 0.0
  %990 = vmatpush1.msra.mxu0 0.0
  %991 = vmatprep.subr.mxu0 0.0
  %992 = vmatpush1.msra.mxu0 0.0
  %993 = vmatprep.subr.mxu0 0.0
  %994 = vmatpush1.msra.mxu0 0.0
  %995 = vmatprep.subr.mxu0 0.0
  %996 = vmatpush1.msra.mxu0 0.0
  %997 = vmatprep.subr.mxu0 0.0
  %998 = vmatpush1.msra.mxu0 0.0
  %999 = vmatprep.subr.mxu0 0.0
  %1000 = vmatpush1.msra.mxu0 0.0
  %1001 = vmatprep.subr.mxu0 0.0
  %1002 = vmatpush1.msra.mxu0 0.0
  %1003 = vmatprep.subr.mxu0 0.0
  %1004 = vmatpush1.msra.mxu0 0.0
  %1005 = vmatprep.subr.mxu0 0.0
  %1006 = vmatpush1.msra.mxu0 0.0
  %1007 = vmatprep.subr.mxu0 0.0
  %1008 = vmatpush1.msra.mxu0 0.0
  %1009 = vmatprep.subr.mxu0 0.0
  %1010 = vmatpush1.msra.mxu0 0.0
  %1011 = vmatprep.mubr.f32.mxu0 0.0
  %1012 = vmatmul.mubr.f32.gmra.mrb[0].mxu0 %v945
  %v1013 = vpop.f32.mrb[0].mxu0
  %v1014 = vadd.f32 %v942, %v1013
  %v1015 = vpop.f32.mrb[0].mxu0
  %1016 = vdwg.mxu0
  %1017 = vst [vmem:[%s8] sm:$0xff] %v1014
  // Predicated region
  $region38: #{network_rollout.1} parent=0 // pred_check
    _
  $region39: #{network_rollout.1} parent=0 // pred_check_branch
    %1019 = sbr.rel (0) target = $region41
  $region40: #{network_rollout.1} parent=0 // pred_region
    _
  $region41: #{network_rollout.1} parent=0 // pred_fallthru
    _
  // Predicated region
  $region42: #{network_rollout.1} parent=0 // pred_check
    _
  $region43: #{network_rollout.1} parent=0 // pred_check_branch
    %1021 = sbr.rel (0) target = $region45
  $region44: #{network_rollout.1} parent=0 // pred_region
    _
  $region45: #{network_rollout.1} parent=0 // pred_fallthru
    _
  // Predicated region
  $region46: #{network_rollout.1} parent=0 // pred_check
    _
  $region47: #{network_rollout.1} parent=0 // pred_check_branch
    %1023 = sbr.rel (0) target = $region49
  $region48: #{network_rollout.1} parent=0 // pred_region
    _
  $region49: #{network_rollout.1} parent=0 // pred_fallthru
    _
  // Predicated region
  $region50: #{network_rollout.1} parent=0 // pred_check
    _
  $region51: #{network_rollout.1} parent=0 // pred_check_branch
    %1025 = sbr.rel (0) target = $region53
  $region52: #{network_rollout.1} parent=0 // pred_region
    _
  $region53: #{network_rollout.1} parent=0 // pred_fallthru
    _
  // Predicated region
  $region54: #{network_rollout.1} parent=0 // pred_check
    _
  $region55: #{network_rollout.1} parent=0 // pred_check_branch
    %1027 = sbr.rel (0) target = $region57
  $region56: #{network_rollout.1} parent=0 // pred_region
    _
  $region57: #{network_rollout.1} parent=0 // pred_fallthru
    _
  // Predicated region
  $region58: #{network_rollout.1} parent=0 // pred_check
    _
  $region59: #{network_rollout.1} parent=0 // pred_check_branch
    %1029 = sbr.rel (0) target = $region61
  $region60: #{network_rollout.1} parent=0 // pred_region
    _
  $region61: #{network_rollout.1} parent=0 // pred_fallthru
    _

</llo_original>
